<compile_context>
chip_gen: v5e
topology: v5e:2x2
jax: 0.10.0
libtpu: 0.0.40
codegen_flags: <defaults>
</compile_context>

<pallas_src>
import jax
import jax.numpy as jnp
import numpy as np
from jax.experimental import pallas as pl
from jax.experimental.pallas import tpu as pltpu

# ---------------- synthetic "model" (the black box passed into UncertaintyModel) ---------
# Linear(D_IN -> HID) + tanh + Linear(HID -> OUT, bias=False)
# uncertainty_layers = [last Linear]  =>  n_uncertainty_parameters = HID * OUT = 128
B, D_IN, HID, OUT = 2, 16, 32, 4
N_PARAMS = HID * OUT          # 128
PACK_W = 128                  # lane-dense packed output width (>= 2*OUT)

_HI = jax.lax.Precision.HIGHEST   # used only in the plain-JAX reference / init path


def model_apply(x, w1, b1, w2):
    """Plain-JAX reference / init-time definition (exact f32 math)."""
    h = jnp.tanh(jnp.dot(x, w1.T, precision=_HI) + b1)
    return jnp.dot(h, w2.T, precision=_HI)


# ---------------- fused Pallas kernel: MLP forward + analytic-Jacobian uncertainty -------
def _fused_kernel(x_ref, w1t_ref, b1_ref, w2t_ref, cmat_ref, out_ref):
    x = x_ref[...]                                                   # (B, D_IN)
    # hidden activation (stays in vregs; reused for preds AND uncertainty)
    h = jnp.tanh(
        jnp.dot(x, w1t_ref[...], preferred_element_type=jnp.float32)
        + b1_ref[...]
    )                                                                # (B, HID)
    preds = jnp.dot(h, w2t_ref[...], preferred_element_type=jnp.float32)   # (B, OUT)

    # Analytic Jacobian of the last bias-free Linear: J[b,o,:] = onehot(o) (x) h[b,:]
    #   => u[b,o] = h[b] @ C_block[o] @ h[b]
    # All OUT diagonal blocks are contracted at once via the lane-dense
    # (HID, OUT*HID) matrix cmat (cmat[:, o*HID:(o+1)*HID] = C_block[o]).
    t = jnp.dot(h, cmat_ref[...], preferred_element_type=jnp.float32)      # (B, OUT*HID)

    # Lane-dense packed output: lanes [0,OUT) = preds, [OUT,2*OUT) = uncertainty.
    out_ref[...] = jnp.zeros_like(out_ref)
    out_ref[:, 0:OUT] = preds
    for o in range(OUT):  # OUT = 4, static unroll; per-block lane reduction (XLU, free slot)
        u_o = jnp.sum(t[:, o * HID:(o + 1) * HID] * h, axis=-1, keepdims=True)   # (B, 1)
        out_ref[:, OUT + o:OUT + o + 1] = u_o


@jax.jit
def uncertainty_model_forward(x, w1t, b1r, w2t, cmat):
    """Single fused pallas_call; returns (predictions, uncertainty) both (B, OUT)."""
    bx = x.shape[0]
    packed = pl.pallas_call(
        _fused_kernel,
        out_shape=jax.ShapeDtypeStruct((bx, PACK_W), jnp.float32),
        grid=(1,),   # TODO(synk): for large batches, grid over B with "parallel" (v7x 2 TCs)
        in_specs=[
            pl.BlockSpec((bx, D_IN), lambda i: (0, 0)),
            pl.BlockSpec((D_IN, HID), lambda i: (0, 0)),
            pl.BlockSpec((1, HID), lambda i: (0, 0)),
            pl.BlockSpec((HID, OUT), lambda i: (0, 0)),
            pl.BlockSpec((HID, OUT * HID), lambda i: (0, 0)),
        ],
        out_specs=pl.BlockSpec((bx, PACK_W), lambda i: (0, 0)),
        compiler_params=pltpu.CompilerParams(dimension_semantics=("arbitrary",)),
    )(x, w1t, b1r, w2t, cmat)
    preds = packed[:, :OUT]
    unc = packed[:, OUT:2 * OUT]
    return preds, unc


# ---------------- init-time setup (constructor + set_hyperparameters path) ---------------
def jacobian_wrt_uncertainty_params(x, w1, b1, w2):
    """Full Jacobian wrt flattened w2 (row-major, like torch .flatten()). Init/reference only."""
    # TODO(synk): generic torch.autograd _jacobian over arbitrary uncertainty layers has no
    # in-kernel equivalent; the forward kernel exploits the analytic last-Linear Jacobian.
    jac = jax.jacrev(lambda w: model_apply(x, w1, b1, w))(w2)    # (B, OUT, OUT, HID)
    return jac.reshape(x.shape[0], OUT, N_PARAMS)


def build_inv_covariance(x_train, w1, b1, w2, C=1.0, sigma=0.1):
    """__init__ + set_hyperparameters path (plain JAX, runs once)."""
    J = jacobian_wrt_uncertainty_params(x_train, w1, b1, w2)     # (Bt, OUT, P)
    pseudo_hessian = jnp.einsum('bop,boq->pq', J, J, precision=_HI) / OUT   # H_i = I/out_size
    inv_cov = C * jnp.linalg.inv(
        pseudo_hessian + (sigma ** 2) * jnp.eye(N_PARAMS, dtype=jnp.float32))
    return inv_cov.astype(jnp.float32)


def prepare_params(w1, b1, w2, inv_cov):
    """One-time hoisted parameter prep: transposes + diagonal blocks of inv_covariance."""
    w1t = jnp.asarray(w1.T, jnp.float32)                         # (D_IN, HID)
    b1r = jnp.asarray(b1, jnp.float32).reshape(1, HID)           # (1, HID)
    w2t = jnp.asarray(w2.T, jnp.float32)                         # (HID, OUT)
    # diagonal (HID, HID) blocks of inv_cov, laid side by side on the lane axis:
    #   cmat[k, o*HID + h'] = inv_cov[o*HID + k, o*HID + h']
    c4 = inv_cov.reshape(OUT, HID, OUT, HID)
    idx = jnp.arange(OUT)
    cblocks = c4[idx, :, idx, :]                                 # (OUT, HID, HID)
    cmat = jnp.transpose(cblocks, (1, 0, 2)).reshape(HID, OUT * HID).astype(jnp.float32)
    return w1t, b1r, w2t, cmat


# ---------------- main --------------------------------------------------------------------
if __name__ == "__main__":
    key = jax.random.PRNGKey(0)
    k1, k2, k3, k4, k5 = jax.random.split(key, 5)

    # deterministic parameter init (shapes from the synthetic model's __init__)
    w1 = jax.random.normal(k1, (HID, D_IN), dtype=jnp.float32) / np.sqrt(D_IN)
    b1 = jax.random.normal(k2, (HID,), dtype=jnp.float32) * 0.1
    w2 = jax.random.normal(k3, (OUT, HID), dtype=jnp.float32) / np.sqrt(HID)

    # synthetic "train_loader" batch -> pseudo-hessian -> set_hyperparameters(C, sigma)
    x_train = jax.random.normal(k4, (4, D_IN), dtype=jnp.float32)
    inv_cov = build_inv_covariance(x_train, w1, b1, w2, C=1.0, sigma=0.1)
    w1t, b1r, w2t, cmat = prepare_params(w1, b1, w2, inv_cov)

    # forward input
    x = jax.random.normal(k5, (B, D_IN), dtype=jnp.float32)

    preds, unc = uncertainty_model_forward(x, w1t, b1r, w2t, cmat)
    preds, unc = jax.block_until_ready((preds, unc))

    # exact-math reference (plain JAX, f32-highest): full Jacobian quadratic form
    preds_ref = model_apply(x, w1, b1, w2)
    J_ref = jacobian_wrt_uncertainty_params(x, w1, b1, w2)
    unc_ref = jnp.einsum('bow,wv,bov->bo', J_ref, inv_cov, J_ref, precision=_HI)

    assert preds.shape == (B, OUT) and unc.shape == (B, OUT)
    # Tolerances sized for default MXU matmul precision (bf16 passes) per the perf review;
    # with f32-exact contraction the kernel matches the reference to ~1e-6.
    np.testing.assert_allclose(np.asarray(preds), np.asarray(preds_ref), rtol=2e-2, atol=2e-2)
    np.testing.assert_allclose(np.asarray(unc), np.asarray(unc_ref), rtol=2e-2, atol=2e-2)

    print("KERNEL_OK")
</pallas_src>

<mosaic_0001>
module attributes {stable_mosaic.version = 11 : i64} {
  func.func @_fused_kernel(%arg0: i32, %arg1: memref<2x16xf32, #tpu.memory_space<vmem>>, %arg2: memref<16x32xf32, #tpu.memory_space<vmem>>, %arg3: memref<1x32xf32, #tpu.memory_space<vmem>>, %arg4: memref<32x4xf32, #tpu.memory_space<vmem>>, %arg5: memref<32x128xf32, #tpu.memory_space<vmem>>, %arg6: memref<2x128xf32, #tpu.memory_space<vmem>>) attributes {dimension_semantics = [#tpu.dimension_semantics<arbitrary>], iteration_bounds = array<i64: 1>, scalar_prefetch = 0 : i64, scratch_operands = 0 : i64, tpu.core_type = #tpu.core_type<tc>, window_params = [{pipeline_mode = #tpu.pipeline_mode<synchronous>, transform_indices = @transform_0, window_bounds = array<i64: 2, 16>}, {pipeline_mode = #tpu.pipeline_mode<synchronous>, transform_indices = @transform_1, window_bounds = array<i64: 16, 32>}, {pipeline_mode = #tpu.pipeline_mode<synchronous>, transform_indices = @transform_2, window_bounds = array<i64: 1, 32>}, {pipeline_mode = #tpu.pipeline_mode<synchronous>, transform_indices = @transform_3, window_bounds = array<i64: 32, 4>}, {pipeline_mode = #tpu.pipeline_mode<synchronous>, transform_indices = @transform_4, window_bounds = array<i64: 32, 128>}, {pipeline_mode = #tpu.pipeline_mode<synchronous>, transform_indices = @transform_5, window_bounds = array<i64: 2, 128>}]} {
    %c0 = arith.constant 0 : index
    %c0_0 = arith.constant 0 : index
    %0 = vector.load %arg1[%c0, %c0_0] : memref<2x16xf32, #tpu.memory_space<vmem>>, vector<2x16xf32>
    %c0_1 = arith.constant 0 : index
    %c0_2 = arith.constant 0 : index
    %1 = vector.load %arg2[%c0_1, %c0_2] : memref<16x32xf32, #tpu.memory_space<vmem>>, vector<16x32xf32>
    %cst = arith.constant dense<0.000000e+00> : vector<2x32xf32>
    %2 = tpu.matmul %0, %1, %cst {dimension_numbers = #tpu.dot_dimension_numbers<[1], [0], [0], [1], [0, 0, 1, 1], [], []>} : vector<2x16xf32>, vector<16x32xf32>, vector<2x32xf32> -> vector<2x32xf32>
    %c0_3 = arith.constant 0 : index
    %c0_4 = arith.constant 0 : index
    %3 = vector.load %arg3[%c0_3, %c0_4] : memref<1x32xf32, #tpu.memory_space<vmem>>, vector<1x32xf32>
    %4 = vector.broadcast %3 : vector<1x32xf32> to vector<2x32xf32>
    %5 = arith.addf %2, %4 : vector<2x32xf32>
    %6 = math.tanh %5 : vector<2x32xf32>
    %c0_5 = arith.constant 0 : index
    %c0_6 = arith.constant 0 : index
    %7 = vector.load %arg4[%c0_5, %c0_6] : memref<32x4xf32, #tpu.memory_space<vmem>>, vector<32x4xf32>
    %cst_7 = arith.constant dense<0.000000e+00> : vector<2x4xf32>
    %8 = tpu.matmul %6, %7, %cst_7 {dimension_numbers = #tpu.dot_dimension_numbers<[1], [0], [0], [1], [0, 0, 1, 1], [], []>} : vector<2x32xf32>, vector<32x4xf32>, vector<2x4xf32> -> vector<2x4xf32>
    %c0_8 = arith.constant 0 : index
    %c0_9 = arith.constant 0 : index
    %9 = vector.load %arg5[%c0_8, %c0_9] : memref<32x128xf32, #tpu.memory_space<vmem>>, vector<32x128xf32>
    %cst_10 = arith.constant dense<0.000000e+00> : vector<2x128xf32>
    %10 = tpu.matmul %6, %9, %cst_10 {dimension_numbers = #tpu.dot_dimension_numbers<[1], [0], [0], [1], [0, 0, 1, 1], [], []>} : vector<2x32xf32>, vector<32x128xf32>, vector<2x128xf32> -> vector<2x128xf32>
    %cst_11 = arith.constant 0.000000e+00 : f32
    %11 = vector.broadcast %cst_11 : f32 to vector<2x128xf32>
    %c0_12 = arith.constant 0 : index
    %c0_13 = arith.constant 0 : index
    %12 = vector.load %arg6[%c0_12, %c0_13] : memref<2x128xf32, #tpu.memory_space<vmem>>, vector<2x128xf32>
    tpu.vector_store %arg6[%c0_12, %c0_13], %11 {strides = array<i32>} : memref<2x128xf32, #tpu.memory_space<vmem>>, vector<2x128xf32>,
    %c0_14 = arith.constant 0 : index
    %c0_15 = arith.constant 0 : index
    %13 = vector.load %arg6[%c0_14, %c0_15] : memref<2x128xf32, #tpu.memory_space<vmem>>, vector<2x4xf32>
    tpu.vector_store %arg6[%c0_14, %c0_15], %8 {strides = array<i32>} : memref<2x128xf32, #tpu.memory_space<vmem>>, vector<2x4xf32>,
    %14 = vector.extract_strided_slice %10 {offsets = [0, 0], sizes = [2, 32], strides = [1, 1]} : vector<2x128xf32> to vector<2x32xf32>
    %15 = arith.mulf %14, %6 : vector<2x32xf32>
    %cst_16 = arith.constant dense<0.000000e+00> : vector<2xf32>
    %16 = vector.multi_reduction <add>, %15, %cst_16 [1] : vector<2x32xf32> to vector<2xf32>
    %17 = vector.shape_cast %16 : vector<2xf32> to vector<2x1xf32>
    %c0_17 = arith.constant 0 : index
    %c4 = arith.constant 4 : index
    %18 = vector.load %arg6[%c0_17, %c4] : memref<2x128xf32, #tpu.memory_space<vmem>>, vector<2x1xf32>
    tpu.vector_store %arg6[%c0_17, %c4], %17 {strides = array<i32>} : memref<2x128xf32, #tpu.memory_space<vmem>>, vector<2x1xf32>,
    %19 = vector.extract_strided_slice %10 {offsets = [0, 32], sizes = [2, 32], strides = [1, 1]} : vector<2x128xf32> to vector<2x32xf32>
    %20 = arith.mulf %19, %6 : vector<2x32xf32>
    %cst_18 = arith.constant dense<0.000000e+00> : vector<2xf32>
    %21 = vector.multi_reduction <add>, %20, %cst_18 [1] : vector<2x32xf32> to vector<2xf32>
    %22 = vector.shape_cast %21 : vector<2xf32> to vector<2x1xf32>
    %c0_19 = arith.constant 0 : index
    %c5 = arith.constant 5 : index
    %23 = vector.load %arg6[%c0_19, %c5] : memref<2x128xf32, #tpu.memory_space<vmem>>, vector<2x1xf32>
    tpu.vector_store %arg6[%c0_19, %c5], %22 {strides = array<i32>} : memref<2x128xf32, #tpu.memory_space<vmem>>, vector<2x1xf32>,
    %24 = vector.extract_strided_slice %10 {offsets = [0, 64], sizes = [2, 32], strides = [1, 1]} : vector<2x128xf32> to vector<2x32xf32>
    %25 = arith.mulf %24, %6 : vector<2x32xf32>
    %cst_20 = arith.constant dense<0.000000e+00> : vector<2xf32>
    %26 = vector.multi_reduction <add>, %25, %cst_20 [1] : vector<2x32xf32> to vector<2xf32>
    %27 = vector.shape_cast %26 : vector<2xf32> to vector<2x1xf32>
    %c0_21 = arith.constant 0 : index
    %c6 = arith.constant 6 : index
    %28 = vector.load %arg6[%c0_21, %c6] : memref<2x128xf32, #tpu.memory_space<vmem>>, vector<2x1xf32>
    tpu.vector_store %arg6[%c0_21, %c6], %27 {strides = array<i32>} : memref<2x128xf32, #tpu.memory_space<vmem>>, vector<2x1xf32>,
    %29 = vector.extract_strided_slice %10 {offsets = [0, 96], sizes = [2, 32], strides = [1, 1]} : vector<2x128xf32> to vector<2x32xf32>
    %30 = arith.mulf %29, %6 : vector<2x32xf32>
    %cst_22 = arith.constant dense<0.000000e+00> : vector<2xf32>
    %31 = vector.multi_reduction <add>, %30, %cst_22 [1] : vector<2x32xf32> to vector<2xf32>
    %32 = vector.shape_cast %31 : vector<2xf32> to vector<2x1xf32>
    %c0_23 = arith.constant 0 : index
    %c7 = arith.constant 7 : index
    %33 = vector.load %arg6[%c0_23, %c7] : memref<2x128xf32, #tpu.memory_space<vmem>>, vector<2x1xf32>
    tpu.vector_store %arg6[%c0_23, %c7], %32 {strides = array<i32>} : memref<2x128xf32, #tpu.memory_space<vmem>>, vector<2x1xf32>,
    return
  }
  func.func @transform_0(%arg0: i32) -> (i32, i32) {
    %c0_i32 = arith.constant 0 : i32
    %c0_i32_0 = arith.constant 0 : i32
    %c0_i32_1 = arith.constant 0 : i32
    return %c0_i32, %c0_i32_0 : i32, i32
  }
  func.func @transform_1(%arg0: i32) -> (i32, i32) {
    %c0_i32 = arith.constant 0 : i32
    %c0_i32_0 = arith.constant 0 : i32
    %c0_i32_1 = arith.constant 0 : i32
    return %c0_i32, %c0_i32_0 : i32, i32
  }
  func.func @transform_2(%arg0: i32) -> (i32, i32) {
    %c0_i32 = arith.constant 0 : i32
    %c0_i32_0 = arith.constant 0 : i32
    %c0_i32_1 = arith.constant 0 : i32
    return %c0_i32, %c0_i32_0 : i32, i32
  }
  func.func @transform_3(%arg0: i32) -> (i32, i32) {
    %c0_i32 = arith.constant 0 : i32
    %c0_i32_0 = arith.constant 0 : i32
    %c0_i32_1 = arith.constant 0 : i32
    return %c0_i32, %c0_i32_0 : i32, i32
  }
  func.func @transform_4(%arg0: i32) -> (i32, i32) {
    %c0_i32 = arith.constant 0 : i32
    %c0_i32_0 = arith.constant 0 : i32
    %c0_i32_1 = arith.constant 0 : i32
    return %c0_i32, %c0_i32_0 : i32, i32
  }
  func.func @transform_5(%arg0: i32) -> (i32, i32) {
    %c0_i32 = arith.constant 0 : i32
    %c0_i32_0 = arith.constant 0 : i32
    %c0_i32_1 = arith.constant 0 : i32
    return %c0_i32, %c0_i32_0 : i32, i32
  }
}

</mosaic_0001>

<llo_original>
// kernel: uncertainty_model_forward.1
$region0: #{uncertainty_model_forward.1}
  #allocation0 [shape = 'u32[]', space=smem, size = 0x4, offset = 0x4, fixed_abs, tag = 'smem constant byte address 0x4 - core index']
  #allocation1 [shape = 'u32[72,128]{1,0:T(1,128)}', space=vmem, size = 0x9000, scoped, tag = 'internal scratch']
  %s0 = inlined_call_operand.vmem [shape: f32[2,16], index: 0, kind: input, shape index: {}]
  %s1 = inlined_call_operand.hbm [shape: f32[16,32], index: 1, kind: input, shape index: {}]
  %s2 = inlined_call_operand.vmem [shape: f32[1,32], index: 2, kind: input, shape index: {}]
  %s3 = inlined_call_operand.vmem [shape: f32[32,4], index: 3, kind: input, shape index: {}]
  %s4 = inlined_call_operand.vmem [shape: f32[32,128], index: 4, kind: input, shape index: {}]
  %s5 = inlined_call_operand.vmem [shape: f32[2,128], index: 5, kind: output, shape index: {}]
  %s6 = sld [smem:[#allocation0]]
  $region34: #{uncertainty_model_forward.1} parent=0
    _
  %s8 = ssub.s32 1, %s6
  %s9 = scalar_select 0, %s8, %s6
  $region1: #{uncertainty_model_forward.1} parent=0
    #allocation2 [shape = 'u8[8192]{0}', space=vmem, size = 0x2000, scoped, tag = 'input window, operand 1, single buffered']
    #allocation3 [shape = 's32[1]{0}', space=sflag, size = 0x4, scoped, tag = 'scoped memory for uncertainty_model_forward.1']
    %10 = vsyncpa [#allocation3], 0
    // Predicated region
    $region2: #{uncertainty_model_forward.1} parent=1 // pred_check
      _
    $region3: #{uncertainty_model_forward.1} parent=1 // pred_check_branch
      %12 = sbr.rel (0) target = $region5
    $region4: #{uncertainty_model_forward.1} parent=1 // pred_region
      _
    $region5: #{uncertainty_model_forward.1} parent=1 // pred_fallthru
      _
    // Predicated region
    $region6: #{uncertainty_model_forward.1} parent=1 // pred_check
      _
    $region7: #{uncertainty_model_forward.1} parent=1 // pred_check_branch
      %14 = sbr.rel (0) target = $region9
    $region8: #{uncertainty_model_forward.1} parent=1 // pred_region
      %16 = vsyncadd [#allocation3], 0
      %s17 = sshll.u32 %s1, 4
      %s18 = int_to_ptr.hbm [resolvable:$true] %s17
      %s19 = sshll.u32 [#allocation2], 4
      %s20 = int_to_ptr.vmem [resolvable:$true] %s19
      %25 = dma.hbm_to_vmem [thread:$0]  %s18, 256, %s20, [#allocation3], 128, 128, 8
    $region9: #{uncertainty_model_forward.1} parent=1 // pred_fallthru
      _
    // Predicated region
    $region10: #{uncertainty_model_forward.1} parent=1 // pred_check
      _
    $region11: #{uncertainty_model_forward.1} parent=1 // pred_check_branch
      %27 = sbr.rel (0) target = $region13
    $region12: #{uncertainty_model_forward.1} parent=1 // pred_region
      _
    $region13: #{uncertainty_model_forward.1} parent=1 // pred_fallthru
      _
    // Predicated region
    $region14: #{uncertainty_model_forward.1} parent=1 // pred_check
      _
    $region15: #{uncertainty_model_forward.1} parent=1 // pred_check_branch
      %29 = sbr.rel (0) target = $region17
    $region16: #{uncertainty_model_forward.1} parent=1 // pred_region
      _
    $region17: #{uncertainty_model_forward.1} parent=1 // pred_fallthru
      _
    // Predicated region
    $region18: #{uncertainty_model_forward.1} parent=1 // pred_check
      _
    $region19: #{uncertainty_model_forward.1} parent=1 // pred_check_branch
      %31 = sbr.rel (0) target = $region21
    $region20: #{uncertainty_model_forward.1} parent=1 // pred_region
      _
    $region21: #{uncertainty_model_forward.1} parent=1 // pred_fallthru
      _
    // Predicated region
    $region22: #{uncertainty_model_forward.1} parent=1 // pred_check
      _
    $region23: #{uncertainty_model_forward.1} parent=1 // pred_check_branch
      %33 = sbr.rel (0) target = $region25
    $region24: #{uncertainty_model_forward.1} parent=1 // pred_region
      %35 = dma.done [#allocation3], 256
    $region25: #{uncertainty_model_forward.1} parent=1 // pred_fallthru
      _
    %v36 = vld [vmem:[%s0] sm:$0x3]
    %v37 = vld [vmem:[#allocation2] sm:$0xff]
    %v38 = vld [vmem:[#allocation2 + $0x8] sm:$0xff]
    %v39 = vld [vmem:[%s2] sm:$0x1]
    %v41 = vperm.slane %v39, 0
    %vm43 = vcmask 130048
    %v45 = vsel %vm43, %v36, 0
    %47 = vmatpush.msra.mxu0 0.0
    %48 = vmatpush.msra.mxu0 0.0
    %49 = vmatpush.msra.mxu0 0.0
    %50 = vmatpush.msra.mxu0 0.0
    %51 = vmatpush.msra.mxu0 0.0
    %52 = vmatpush.msra.mxu0 0.0
    %53 = vmatpush.msra.mxu0 0.0
    %54 = vmatpush.msra.mxu0 0.0
    %55 = vmatpush.msra.mxu0 0.0
    %56 = vmatpush.msra.mxu0 0.0
    %57 = vmatpush.msra.mxu0 0.0
    %58 = vmatpush.msra.mxu0 0.0
    %59 = vmatpush.msra.mxu0 0.0
    %60 = vmatpush.msra.mxu0 0.0
    %61 = vmatpush.msra.mxu0 %v38
    %62 = vmatpush.msra.mxu0 %v37
    %63 = vmatmul.f32.gmra.mxu0 %v45
    %v64 = vpop.f32.mrf.mxu0
    %v65 = vadd.f32 %v41, %v64
    %66 = vdwg.mxu0
    %v67 = vtanh.pop %v65
    %v68 = vld [vmem:[%s3] sm:$0xff]
    %v69 = vld [vmem:[%s3 + $0x8] sm:$0xff]
    %v70 = vld [vmem:[%s3 + $0x10] sm:$0xff]
    %v71 = vld [vmem:[%s3 + $0x18] sm:$0xff]
    %vm72 = vcmask 261120
    %v74 = vsel %vm72, %v67, 0
    %76 = vmatpush.msra.mxu0 0.0
    %77 = vmatpush.msra.mxu0 0.0
    %78 = vmatpush.msra.mxu0 0.0
    %79 = vmatpush.msra.mxu0 0.0
    %80 = vmatpush.msra.mxu0 0.0
    %81 = vmatpush.msra.mxu0 0.0
    %82 = vmatpush.msra.mxu0 0.0
    %83 = vmatpush.msra.mxu0 0.0
    %84 = vmatpush.msra.mxu0 0.0
    %85 = vmatpush.msra.mxu0 0.0
    %86 = vmatpush.msra.mxu0 0.0
    %87 = vmatpush.msra.mxu0 0.0
    %88 = vmatpush.msra.mxu0 %v71
    %89 = vmatpush.msra.mxu0 %v70
    %90 = vmatpush.msra.mxu0 %v69
    %91 = vmatpush.msra.mxu0 %v68
    %92 = vmatmul.f32.gmra.mxu0 %v74
    %v93 = vpop.f32.mrf.mxu0
    %v94 = vadd.f32 0.0, %v93
    %95 = vdwg.mxu0
    %v96 = vld [vmem:[%s4] sm:$0xff]
    %v97 = vld [vmem:[%s4 + $0x8] sm:$0xff]
    %v98 = vld [vmem:[%s4 + $0x10] sm:$0xff]
    %v99 = vld [vmem:[%s4 + $0x18] sm:$0xff]
    %100 = vmatpush.msra.mxu0 0.0
    %101 = vmatpush.msra.mxu0 0.0
    %102 = vmatpush.msra.mxu0 0.0
    %103 = vmatpush.msra.mxu0 0.0
    %104 = vmatpush.msra.mxu0 0.0
    %105 = vmatpush.msra.mxu0 0.0
    %106 = vmatpush.msra.mxu0 0.0
    %107 = vmatpush.msra.mxu0 0.0
    %108 = vmatpush.msra.mxu0 0.0
    %109 = vmatpush.msra.mxu0 0.0
    %110 = vmatpush.msra.mxu0 0.0
    %111 = vmatpush.msra.mxu0 0.0
    %112 = vmatpush.msra.mxu0 %v99
    %113 = vmatpush.msra.mxu0 %v98
    %114 = vmatpush.msra.mxu0 %v97
    %115 = vmatpush.msra.mxu0 %v96
    %116 = vmatmul.f32.gmra.mxu0 %v74
    %v117 = vpop.f32.mrf.mxu0
    %v118 = vadd.f32 0.0, %v117
    %119 = vdwg.mxu0
    %120 = vst [vmem:[%s5] sm:$0x3] 0.0
    %vm121 = vcmask 25600
    %122 = vst.msk [vmem:[%s5] sm:$0x3] %vm121, %v94
    %v123 = vmul.f32 %v118, %v67
    %vm124 = vcmask 254976
    %v125 = vsel %vm124, %v123, 0.0
    %126 = vadd.xlane.f32.xlu0 %v125
    %v127 = vpop.xlane.xlu0 %126
    %vm128 = vcmask 33824
    %129 = vst.msk [vmem:[%s5] sm:$0x3] %vm128, %v127
    %130 = vrot.lane.b32.xlu0 %v67, 32
    %v131 = vpop.permute.xlu0 %130
    %v133 = vmul.f32 %v118, %v131
    %135 = vrot.lane.b32.xlu0 %v133, 96
    %v136 = vpop.permute.xlu0 %135
    %v138 = vsel %vm124, %v136, 0.0
    %139 = vadd.xlane.f32.xlu0 %v138
    %v140 = vpop.xlane.xlu0 %139
    %vm141 = vcmask 42024
    %142 = vst.msk [vmem:[%s5] sm:$0x3] %vm141, %v140
    %143 = vrot.lane.b32.xlu0 %v67, 64
    %v144 = vpop.permute.xlu0 %143
    %v146 = vmul.f32 %v118, %v144
    %148 = vrot.lane.b32.xlu0 %v146, 64
    %v149 = vpop.permute.xlu0 %148
    %v151 = vsel %vm124, %v149, 0.0
    %152 = vadd.xlane.f32.xlu0 %v151
    %v153 = vpop.xlane.xlu0 %152
    %vm154 = vcmask 50224
    %155 = vst.msk [vmem:[%s5] sm:$0x3] %vm154, %v153
    %156 = vrot.lane.b32.xlu0 %v67, 96
    %v157 = vpop.permute.xlu0 %156
    %v159 = vmul.f32 %v118, %v157
    %161 = vrot.lane.b32.xlu0 %v159, 32
    %v162 = vpop.permute.xlu0 %161
    %v164 = vsel %vm124, %v162, 0.0
    %165 = vadd.xlane.f32.xlu0 %v164
    %v166 = vpop.xlane.xlu0 %165
    %vm167 = vcmask 58424
    %168 = vst.msk [vmem:[%s5] sm:$0x3] %vm167, %v166
    // Predicated region
    $region26: #{uncertainty_model_forward.1} parent=1 // pred_check
      _
    $region27: #{uncertainty_model_forward.1} parent=1 // pred_check_branch
      %170 = sbr.rel (0) target = $region29
    $region28: #{uncertainty_model_forward.1} parent=1 // pred_region
      _
    $region29: #{uncertainty_model_forward.1} parent=1 // pred_fallthru
      _
    // Predicated region
    $region30: #{uncertainty_model_forward.1} parent=1 // pred_check
      _
    $region31: #{uncertainty_model_forward.1} parent=1 // pred_check_branch
      %172 = sbr.rel (0) target = $region33
    $region32: #{uncertainty_model_forward.1} parent=1 // pred_region
      _
    $region33: #{uncertainty_model_forward.1} parent=1 // pred_fallthru
      _
    %173 = vsyncpa [#allocation3], 1

</llo_original>
